<compile_context>
chip_gen: v7x
topology: tpu7x:2x2x1
jax: 0.10.0
libtpu: 0.0.40
codegen_flags: <defaults>
</compile_context>

<pallas_src>
import numpy as np
import jax
import jax.numpy as jnp
from jax.experimental import pallas as pl
from jax.experimental.pallas import tpu as pltpu

NEG_SLOPE = 0.01
BN_EPS = 1e-5
H, W = 64, 3            # spatial size implied by Linear(64,64) and Conv2d(3,1,1)
IN_LANES = H * W        # 192: flat (h*3+w) input layout
HID = 256               # hidden slab width (192 real lanes, padded to 2 vregs)
OUT_LANES = 128         # output slab: feat in [0,64), y in [64,66), rest zero


def _leaky(v):
    return jnp.where(v >= 0, v, NEG_SLOPE * v)


def _cdiv(a, b):
    return -(-a // b)


def _ceil_to(n, m):
    return _cdiv(n, m) * m


# ------------------------------ kernel ------------------------------

def fa3_kernel(x_ref, b1m_ref, b2m_ref, w3m_ref, wcat_ref, bias_ref, out_ref):
    """x_ref: (TN,192).  b1m: (192,256), b2m: (256,256), w3m: (256,128),
    wcat: (128,128) VMEM weight matrices.  bias_ref: (4,256) VMEM
    [b1 | b2 | b3 | bf/bc] rows.  out_ref: (TN,128) lane-dense slab."""
    b = bias_ref[...]                                   # (4, 256)

    x = x_ref[...]                                      # (TN, 192)
    h = jnp.dot(x, b1m_ref[...], preferred_element_type=jnp.float32) + b[0:1, :]
    h = _leaky(h)                                       # (TN, 256) conv_layer1
    h = jnp.dot(h, b2m_ref[...], preferred_element_type=jnp.float32) + b[1:2, :]
    h = _leaky(h)                                       # (TN, 256) conv_layer2
    v = jnp.dot(h, w3m_ref[...], preferred_element_type=jnp.float32) + b[2:3, :OUT_LANES]
    v = _leaky(v)                                       # (TN, 128) conv_layer3 (lanes 64+ are 0)
    out_ref[...] = (jnp.dot(v, wcat_ref[...], preferred_element_type=jnp.float32)
                    + b[3:4, :OUT_LANES])               # feature + fused FC


# ----------------- constant band-matrix construction (wrapper-side) -----------------

def _conv_band_indices(h=H, w=W):
    rows, cols, taps = [], [], []
    for ho in range(h):
        for wo in range(w):
            o = ho * w + wo
            for i in range(3):
                for j in range(3):
                    hi, wi = ho + i - 1, wo + j - 1
                    if 0 <= hi < h and 0 <= wi < w:     # H/W zero padding baked in
                        rows.append(hi * w + wi)
                        cols.append(o)
                        taps.append(i * 3 + j)
    return (np.asarray(rows, np.int32), np.asarray(cols, np.int32),
            np.asarray(taps, np.int32))


_BAND_ROWS, _BAND_COLS, _BAND_TAPS = _conv_band_indices()


def _band_matrix(k33, in_dim, out_dim):
    vals = k33.reshape(-1)[_BAND_TAPS]
    return jnp.zeros((in_dim, out_dim), jnp.float32).at[_BAND_ROWS, _BAND_COLS].set(vals)


def prepare_params(folded):
    """Build the MXU weight matrices / bias slab once from BN-folded params."""
    (w1, b1, w2, b2, w3, b3, wf_t, bf, wc_t, bc) = folded

    b1m = _band_matrix(w1.astype(jnp.float32), IN_LANES, HID)     # (192, 256)
    b2m = _band_matrix(w2.astype(jnp.float32), HID, HID)          # (256, 256)

    h_idx = np.arange(H)
    w3m = jnp.zeros((HID, OUT_LANES), jnp.float32)                # (256, 128)
    for wc in range(W):
        w3m = w3m.at[h_idx * W + wc, h_idx].set(w3[wc])

    # feature + FC fused: y = feat @ Wc^T + bc = v @ (Wf^T Wc^T) + (bf Wc^T + bc)
    wfc = (wf_t @ wc_t).astype(jnp.float32)                       # (64, 2)
    bfc = (bf @ wc_t + bc).astype(jnp.float32)                    # (2,)
    wcat = jnp.zeros((OUT_LANES, OUT_LANES), jnp.float32)
    wcat = wcat.at[:H, :H].set(wf_t).at[:H, H:H + 2].set(wfc)

    bias = jnp.zeros((4, HID), jnp.float32)
    bias = bias.at[0, :IN_LANES].set(b1)
    bias = bias.at[1, :IN_LANES].set(b2)
    bias = bias.at[2, :H].set(b3)
    bias = bias.at[3, :H].set(bf).at[3, H:H + 2].set(bfc)
    return (b1m, b2m, w3m, wcat, bias)


def _pick_tn(n, tn=None):
    n8 = _ceil_to(max(n, 1), 8)
    if tn is None:
        t = min(512, n8)
        # prefer >=4 grid steps on big batches so both v7x TensorCores pipeline
        if _cdiv(n, t) in (2, 3):
            t = _ceil_to(_cdiv(n, 4), 8)
        return max(8, t)
    return max(8, min(_ceil_to(tn, 8), n8))


def feature_aggregator3_pallas(x_nchw, prepared, tn=None):
    b1m, b2m, w3m, wcat, bias = prepared
    n = x_nchw.shape[0]

    # Flat (h*3+w) layout: pure view of the NCHW input, no HBM transpose pass.
    x = x_nchw.reshape(n, IN_LANES).astype(jnp.float32)

    tn_ = _pick_tn(n, tn)
    grid = (_cdiv(n, tn_),)          # ragged tail handled by Pallas masked DMA

    out = pl.pallas_call(
        fa3_kernel,
        out_shape=jax.ShapeDtypeStruct((n, OUT_LANES), jnp.float32),
        grid_spec=pltpu.PrefetchScalarGridSpec(
            num_scalar_prefetch=0,
            grid=grid,
            in_specs=[
                pl.BlockSpec((tn_, IN_LANES), lambda i: (i, 0)),       # x tile
                pl.BlockSpec((IN_LANES, HID), lambda i: (0, 0)),       # B1
                pl.BlockSpec((HID, HID), lambda i: (0, 0)),            # B2
                pl.BlockSpec((HID, OUT_LANES), lambda i: (0, 0)),      # W3
                pl.BlockSpec((OUT_LANES, OUT_LANES), lambda i: (0, 0)),  # Wcat
                pl.BlockSpec((4, HID), lambda i: (0, 0)),              # biases
            ],
            out_specs=pl.BlockSpec((tn_, OUT_LANES), lambda i: (i, 0)),
        ),
        compiler_params=pltpu.CompilerParams(
            dimension_semantics=("parallel",)),
    )(x, b1m, b2m, w3m, wcat, bias)

    feat = out[:n, :H]
    y = out[:n, H:H + 2]
    return feat, y


# ---------------- parameter construction (deterministic) + BN folding ----------------

def make_raw_params(key):
    ks = jax.random.split(key, 16)
    def nrm(k, shape, scale=0.1):
        return (scale * jax.random.normal(k, shape)).astype(jnp.float32)
    p = {}
    p["w1"] = nrm(ks[0], (1, 1, 3, 3)); p["b1"] = nrm(ks[1], (1,))
    p["g1"] = 1.0 + nrm(ks[2], (1,));   p["be1"] = nrm(ks[2], (1,), 0.05)
    p["m1"] = nrm(ks[3], (1,), 0.05);   p["v1"] = 1.0 + jnp.abs(nrm(ks[3], (1,)))
    p["w2"] = nrm(ks[4], (1, 1, 3, 3)); p["b2"] = nrm(ks[5], (1,))
    p["g2"] = 1.0 + nrm(ks[6], (1,));   p["be2"] = nrm(ks[6], (1,), 0.05)
    p["m2"] = nrm(ks[7], (1,), 0.05);   p["v2"] = 1.0 + jnp.abs(nrm(ks[7], (1,)))
    p["w3"] = nrm(ks[8], (1, 3, 1, 1)); p["b3"] = nrm(ks[9], (1,))
    p["g3"] = 1.0 + nrm(ks[10], (1,));  p["be3"] = nrm(ks[10], (1,), 0.05)
    p["m3"] = nrm(ks[11], (1,), 0.05);  p["v3"] = 1.0 + jnp.abs(nrm(ks[11], (1,)))
    p["Wf"] = nrm(ks[12], (64, 64));    p["bf"] = nrm(ks[13], (64,))
    p["Wc"] = nrm(ks[14], (2, 64));     p["bc"] = nrm(ks[15], (2,))
    return p


def fold_params(p):
    def fold(w_spatial, b, g, be, m, v):
        s = g[0] / jnp.sqrt(v[0] + BN_EPS)
        return (w_spatial * s).astype(jnp.float32), \
               (b[0] * s + be[0] - m[0] * s).astype(jnp.float32)
    w1, b1 = fold(p["w1"][0, 0], p["b1"], p["g1"], p["be1"], p["m1"], p["v1"])        # (3,3)
    w2, b2 = fold(p["w2"][0, 0], p["b2"], p["g2"], p["be2"], p["m2"], p["v2"])        # (3,3)
    w3, b3 = fold(p["w3"][0, :, 0, 0], p["b3"], p["g3"], p["be3"], p["m3"], p["v3"])  # (3,)
    return (w1, b1, w2, b2, w3, b3,
            p["Wf"].T.astype(jnp.float32), p["bf"],
            p["Wc"].T.astype(jnp.float32), p["bc"])


# ---------------- plain-JAX reference (mirrors the PyTorch forward) ----------------

def reference_forward(x_nchw, p):
    def conv_bn_lrelu(x, w, b, g, be, m, v, pad):
        y = jax.lax.conv_general_dilated(
            x, w, window_strides=(1, 1), padding=((pad, pad), (pad, pad)),
            dimension_numbers=("NCHW", "OIHW", "NCHW"))
        y = y + b.reshape(1, -1, 1, 1)
        y = (y - m.reshape(1, -1, 1, 1)) / jnp.sqrt(v.reshape(1, -1, 1, 1) + BN_EPS)
        y = y * g.reshape(1, -1, 1, 1) + be.reshape(1, -1, 1, 1)
        return jnp.where(y >= 0, y, NEG_SLOPE * y)

    x = conv_bn_lrelu(x_nchw, p["w1"], p["b1"], p["g1"], p["be1"], p["m1"], p["v1"], 1)
    x = conv_bn_lrelu(x, p["w2"], p["b2"], p["g2"], p["be2"], p["m2"], p["v2"], 1)
    x = jnp.transpose(x, (0, 3, 2, 1))                      # torch transpose(1,3)
    x = conv_bn_lrelu(x, p["w3"], p["b3"], p["g3"], p["be3"], p["m3"], p["v3"], 0)
    x = x.reshape(x.shape[0], -1)                           # (N, 64)
    feat = x @ p["Wf"].T + p["bf"]
    y = feat @ p["Wc"].T + p["bc"]
    return feat, y


if __name__ == "__main__":
    key = jax.random.PRNGKey(0)
    k_x, k_p = jax.random.split(key)
    raw = make_raw_params(k_p)
    folded = fold_params(raw)
    prepared = prepare_params(folded)

    TOL = 1e-3

    # small batch (N=2): single 8-row ragged tile
    N = 2
    x = jax.random.normal(k_x, (N, 1, H, W), dtype=jnp.float32)   # NCHW (2,1,64,3)
    feat, y = feature_aggregator3_pallas(x, prepared)
    feat, y = jax.block_until_ready(feat), jax.block_until_ready(y)
    feat_ref, y_ref = reference_forward(x, raw)
    assert feat.shape == (N, 64) and y.shape == (N, 2)
    assert float(jnp.max(jnp.abs(feat - feat_ref))) < TOL
    assert float(jnp.max(jnp.abs(y - y_ref))) < TOL

    # larger batch: multi-step "parallel" grid with a ragged last block (no wrapper pad)
    N2 = 300
    x2 = jax.random.normal(jax.random.PRNGKey(1), (N2, 1, H, W), dtype=jnp.float32)
    feat2, y2 = feature_aggregator3_pallas(x2, prepared, tn=128)
    feat2, y2 = jax.block_until_ready(feat2), jax.block_until_ready(y2)
    feat2_ref, y2_ref = reference_forward(x2, raw)
    assert float(jnp.max(jnp.abs(feat2 - feat2_ref))) < TOL
    assert float(jnp.max(jnp.abs(y2 - y2_ref))) < TOL

    print("KERNEL_OK")
</pallas_src>

<mosaic_0001>
module attributes {stable_mosaic.version = 11 : i64} {
  func.func @fa3_kernel(%arg0: i32, %arg1: memref<8x192xf32, #tpu.memory_space<vmem>>, %arg2: memref<192x256xf32, #tpu.memory_space<vmem>>, %arg3: memref<256x256xf32, #tpu.memory_space<vmem>>, %arg4: memref<256x128xf32, #tpu.memory_space<vmem>>, %arg5: memref<128x128xf32, #tpu.memory_space<vmem>>, %arg6: memref<4x256xf32, #tpu.memory_space<vmem>>, %arg7: memref<8x128xf32, #tpu.memory_space<vmem>>) attributes {dimension_semantics = [#tpu.dimension_semantics<parallel>], iteration_bounds = array<i64: 1>, scalar_prefetch = 0 : i64, scratch_operands = 0 : i64, tpu.core_type = #tpu.core_type<tc>, window_params = [{transform_indices = @transform_0, window_bounds = array<i64: 8, 192>}, {pipeline_mode = #tpu.pipeline_mode<synchronous>, transform_indices = @transform_1, window_bounds = array<i64: 192, 256>}, {pipeline_mode = #tpu.pipeline_mode<synchronous>, transform_indices = @transform_2, window_bounds = array<i64: 256, 256>}, {pipeline_mode = #tpu.pipeline_mode<synchronous>, transform_indices = @transform_3, window_bounds = array<i64: 256, 128>}, {pipeline_mode = #tpu.pipeline_mode<synchronous>, transform_indices = @transform_4, window_bounds = array<i64: 128, 128>}, {pipeline_mode = #tpu.pipeline_mode<synchronous>, transform_indices = @transform_5, window_bounds = array<i64: 4, 256>}, {transform_indices = @transform_6, window_bounds = array<i64: 8, 128>}]} {
    %c0 = arith.constant 0 : index
    %c0_0 = arith.constant 0 : index
    %0 = vector.load %arg6[%c0, %c0_0] : memref<4x256xf32, #tpu.memory_space<vmem>>, vector<4x256xf32>
    %c0_1 = arith.constant 0 : index
    %c0_2 = arith.constant 0 : index
    %1 = vector.load %arg1[%c0_1, %c0_2] : memref<8x192xf32, #tpu.memory_space<vmem>>, vector<8x192xf32>
    %c0_3 = arith.constant 0 : index
    %c0_4 = arith.constant 0 : index
    %2 = vector.load %arg2[%c0_3, %c0_4] : memref<192x256xf32, #tpu.memory_space<vmem>>, vector<192x256xf32>
    %cst = arith.constant dense<0.000000e+00> : vector<8x256xf32>
    %3 = tpu.matmul %1, %2, %cst {dimension_numbers = #tpu.dot_dimension_numbers<[1], [0], [0], [1], [0, 0, 1, 1], [], []>} : vector<8x192xf32>, vector<192x256xf32>, vector<8x256xf32> -> vector<8x256xf32>
    %4 = vector.extract_strided_slice %0 {offsets = [0, 0], sizes = [1, 256], strides = [1, 1]} : vector<4x256xf32> to vector<1x256xf32>
    %5 = vector.broadcast %4 : vector<1x256xf32> to vector<8x256xf32>
    %6 = arith.addf %3, %5 : vector<8x256xf32>
    %cst_5 = arith.constant 0.000000e+00 : f32
    %7 = vector.broadcast %cst_5 : f32 to vector<8x256xf32>
    %8 = arith.cmpf oge, %6, %7 : vector<8x256xf32>
    %cst_6 = arith.constant 0.00999999977 : f32
    %9 = vector.broadcast %cst_6 : f32 to vector<8x256xf32>
    %10 = arith.mulf %9, %6 : vector<8x256xf32>
    %11 = arith.select %8, %6, %10 : vector<8x256xi1>, vector<8x256xf32>
    %c0_7 = arith.constant 0 : index
    %c0_8 = arith.constant 0 : index
    %12 = vector.load %arg3[%c0_7, %c0_8] : memref<256x256xf32, #tpu.memory_space<vmem>>, vector<256x256xf32>
    %cst_9 = arith.constant dense<0.000000e+00> : vector<8x256xf32>
    %13 = tpu.matmul %11, %12, %cst_9 {dimension_numbers = #tpu.dot_dimension_numbers<[1], [0], [0], [1], [0, 0, 1, 1], [], []>} : vector<8x256xf32>, vector<256x256xf32>, vector<8x256xf32> -> vector<8x256xf32>
    %14 = vector.extract_strided_slice %0 {offsets = [1, 0], sizes = [1, 256], strides = [1, 1]} : vector<4x256xf32> to vector<1x256xf32>
    %15 = vector.broadcast %14 : vector<1x256xf32> to vector<8x256xf32>
    %16 = arith.addf %13, %15 : vector<8x256xf32>
    %cst_10 = arith.constant 0.000000e+00 : f32
    %17 = vector.broadcast %cst_10 : f32 to vector<8x256xf32>
    %18 = arith.cmpf oge, %16, %17 : vector<8x256xf32>
    %cst_11 = arith.constant 0.00999999977 : f32
    %19 = vector.broadcast %cst_11 : f32 to vector<8x256xf32>
    %20 = arith.mulf %19, %16 : vector<8x256xf32>
    %21 = arith.select %18, %16, %20 : vector<8x256xi1>, vector<8x256xf32>
    %c0_12 = arith.constant 0 : index
    %c0_13 = arith.constant 0 : index
    %22 = vector.load %arg4[%c0_12, %c0_13] : memref<256x128xf32, #tpu.memory_space<vmem>>, vector<256x128xf32>
    %cst_14 = arith.constant dense<0.000000e+00> : vector<8x128xf32>
    %23 = tpu.matmul %21, %22, %cst_14 {dimension_numbers = #tpu.dot_dimension_numbers<[1], [0], [0], [1], [0, 0, 1, 1], [], []>} : vector<8x256xf32>, vector<256x128xf32>, vector<8x128xf32> -> vector<8x128xf32>
    %24 = vector.extract_strided_slice %0 {offsets = [2, 0], sizes = [1, 128], strides = [1, 1]} : vector<4x256xf32> to vector<1x128xf32>
    %25 = vector.broadcast %24 : vector<1x128xf32> to vector<8x128xf32>
    %26 = arith.addf %23, %25 : vector<8x128xf32>
    %cst_15 = arith.constant 0.000000e+00 : f32
    %27 = vector.broadcast %cst_15 : f32 to vector<8x128xf32>
    %28 = arith.cmpf oge, %26, %27 : vector<8x128xf32>
    %cst_16 = arith.constant 0.00999999977 : f32
    %29 = vector.broadcast %cst_16 : f32 to vector<8x128xf32>
    %30 = arith.mulf %29, %26 : vector<8x128xf32>
    %31 = arith.select %28, %26, %30 : vector<8x128xi1>, vector<8x128xf32>
    %c0_17 = arith.constant 0 : index
    %c0_18 = arith.constant 0 : index
    %32 = vector.load %arg5[%c0_17, %c0_18] : memref<128x128xf32, #tpu.memory_space<vmem>>, vector<128x128xf32>
    %cst_19 = arith.constant dense<0.000000e+00> : vector<8x128xf32>
    %33 = tpu.matmul %31, %32, %cst_19 {dimension_numbers = #tpu.dot_dimension_numbers<[1], [0], [0], [1], [0, 0, 1, 1], [], []>} : vector<8x128xf32>, vector<128x128xf32>, vector<8x128xf32> -> vector<8x128xf32>
    %34 = vector.extract_strided_slice %0 {offsets = [3, 0], sizes = [1, 128], strides = [1, 1]} : vector<4x256xf32> to vector<1x128xf32>
    %35 = vector.broadcast %34 : vector<1x128xf32> to vector<8x128xf32>
    %36 = arith.addf %33, %35 : vector<8x128xf32>
    %c0_20 = arith.constant 0 : index
    %c0_21 = arith.constant 0 : index
    %37 = vector.load %arg7[%c0_20, %c0_21] : memref<8x128xf32, #tpu.memory_space<vmem>>, vector<8x128xf32>
    tpu.vector_store %arg7[%c0_20, %c0_21], %36 {strides = array<i32>} : memref<8x128xf32, #tpu.memory_space<vmem>>, vector<8x128xf32>,
    return
  }
  func.func @transform_0(%arg0: i32) -> (i32, i32) {
    %c0_i32 = arith.constant 0 : i32
    %c0_i32_0 = arith.constant 0 : i32
    return %arg0, %c0_i32 : i32, i32
  }
  func.func @transform_1(%arg0: i32) -> (i32, i32) {
    %c0_i32 = arith.constant 0 : i32
    %c0_i32_0 = arith.constant 0 : i32
    %c0_i32_1 = arith.constant 0 : i32
    return %c0_i32, %c0_i32_0 : i32, i32
  }
  func.func @transform_2(%arg0: i32) -> (i32, i32) {
    %c0_i32 = arith.constant 0 : i32
    %c0_i32_0 = arith.constant 0 : i32
    %c0_i32_1 = arith.constant 0 : i32
    return %c0_i32, %c0_i32_0 : i32, i32
  }
  func.func @transform_3(%arg0: i32) -> (i32, i32) {
    %c0_i32 = arith.constant 0 : i32
    %c0_i32_0 = arith.constant 0 : i32
    %c0_i32_1 = arith.constant 0 : i32
    return %c0_i32, %c0_i32_0 : i32, i32
  }
  func.func @transform_4(%arg0: i32) -> (i32, i32) {
    %c0_i32 = arith.constant 0 : i32
    %c0_i32_0 = arith.constant 0 : i32
    %c0_i32_1 = arith.constant 0 : i32
    return %c0_i32, %c0_i32_0 : i32, i32
  }
  func.func @transform_5(%arg0: i32) -> (i32, i32) {
    %c0_i32 = arith.constant 0 : i32
    %c0_i32_0 = arith.constant 0 : i32
    %c0_i32_1 = arith.constant 0 : i32
    return %c0_i32, %c0_i32_0 : i32, i32
  }
  func.func @transform_6(%arg0: i32) -> (i32, i32) {
    %c0_i32 = arith.constant 0 : i32
    %c0_i32_0 = arith.constant 0 : i32
    return %arg0, %c0_i32 : i32, i32
  }
}

</mosaic_0001>

<llo_original>
// kernel: tpu_custom_call.1
$region0: #{tpu_custom_call.1}
  #allocation0 [shape = 'u32[]', space=smem, size = 0x4, offset = 0x4, fixed_abs, tag = 'smem constant byte address 0x4 - core index']
  #allocation1 [shape = 'u32[144,128]{1,0:T(1,128)}', space=vmem, size = 0x12000, scoped, tag = 'internal scratch']
  %s0 = inlined_call_operand.hbm [shape: f32[2,192], index: 0, kind: input, shape index: {}]
  %s1 = inlined_call_operand.hbm [shape: f32[192,256], index: 1, kind: input, shape index: {}]
  %s2 = inlined_call_operand.hbm [shape: f32[256,256], index: 2, kind: input, shape index: {}]
  %s3 = inlined_call_operand.hbm [shape: f32[256,128], index: 3, kind: input, shape index: {}]
  %s4 = inlined_call_operand.hbm [shape: f32[128,128], index: 4, kind: input, shape index: {}]
  %s5 = inlined_call_operand.vmem [shape: f32[4,256], index: 5, kind: input, shape index: {}]
  %s6 = inlined_call_operand.hbm [shape: f32[2,128], index: 6, kind: output, shape index: {}]
  %s7 = sld [smem:[#allocation0]]
  $region54: #{tpu_custom_call.1} parent=0
    _
  %s9 = ssub.s32 1, %s7
  %s10 = scalar_select 0, %s9, %s7
  $region1: #{tpu_custom_call.1} parent=0
    #allocation2 [shape = 'u8[8192]{0}', space=vmem, size = 0x2000, scoped, tag = 'input window, operand 0, single buffered']
    #allocation3 [shape = 's32[1]{0}', space=sflag, size = 0x4, scoped, tag = 'scoped memory for tpu_custom_call.1']
    #allocation4 [shape = 's32[1]{0}', space=sflag, size = 0x4, scoped, tag = 'scoped memory for tpu_custom_call.1']
    #allocation5 [shape = 'u8[196608]{0}', space=vmem, size = 0x30000, scoped, tag = 'input window, operand 1, single buffered']
    #allocation6 [shape = 's32[1]{0}', space=sflag, size = 0x4, scoped, tag = 'scoped memory for tpu_custom_call.1']
    #allocation7 [shape = 'u8[262144]{0}', space=vmem, size = 0x40000, scoped, tag = 'input window, operand 2, single buffered']
    #allocation8 [shape = 'u8[131072]{0}', space=vmem, size = 0x20000, scoped, tag = 'input window, operand 3, single buffered']
    #allocation9 [shape = 's32[1]{0}', space=sflag, size = 0x4, scoped, tag = 'scoped memory for tpu_custom_call.1']
    #allocation10 [shape = 'u8[65536]{0}', space=vmem, size = 0x10000, scoped, tag = 'input window, operand 4, single buffered']
    #allocation11 [shape = 'u8[4096]{0}', space=vmem, size = 0x1000, scoped, tag = 'output window, operand 0, single buffered']
    %11 = vsyncpa [#allocation3], 0
    %12 = vsyncpa [#allocation6], 0
    %13 = vsyncpa [#allocation9], 0
    %14 = vsyncpa [#allocation4], 0
    // Predicated region
    $region2: #{tpu_custom_call.1} parent=1 // pred_check
      _
    $region3: #{tpu_custom_call.1} parent=1 // pred_check_branch
      %16 = sbr.rel (0) target = $region5
    $region4: #{tpu_custom_call.1} parent=1 // pred_region
      %s18 = ssub.s32 256, 64
      %19 = vsyncadd [#allocation3], %s18
      %s20 = sshll.u32 [#allocation2], 4
      %s21 = int_to_ptr.vmem [resolvable:$true] %s20
      %26 = dma.hbm_to_vmem [thread:$0]  %s0, 64, %s21, [#allocation3], 64, 64, 4
    $region5: #{tpu_custom_call.1} parent=1 // pred_fallthru
      _
    // Predicated region
    $region6: #{tpu_custom_call.1} parent=1 // pred_check
      _
    $region7: #{tpu_custom_call.1} parent=1 // pred_check_branch
      %28 = sbr.rel (0) target = $region9
    $region8: #{tpu_custom_call.1} parent=1 // pred_region
      %s30 = ssub.s32 6144, 6144
      %31 = vsyncadd [#allocation6], %s30
      %s32 = sshll.u32 [#allocation5], 4
      %s33 = int_to_ptr.vmem [resolvable:$true] %s32
      %38 = dma.hbm_to_vmem [thread:$0]  %s1, 6144, %s33, [#allocation6], 256, 256, 16
    $region9: #{tpu_custom_call.1} parent=1 // pred_fallthru
      _
    // Predicated region
    $region10: #{tpu_custom_call.1} parent=1 // pred_check
      _
    $region11: #{tpu_custom_call.1} parent=1 // pred_check_branch
      %40 = sbr.rel (0) target = $region13
    $region12: #{tpu_custom_call.1} parent=1 // pred_region
      %s42 = ssub.s32 8192, 8192
      %43 = vsyncadd [#allocation6], %s42
      %s44 = sshll.u32 [#allocation7], 4
      %s45 = int_to_ptr.vmem [resolvable:$true] %s44
      %50 = dma.hbm_to_vmem [thread:$0]  %s2, 8192, %s45, [#allocation6], 256, 256, 16
    $region13: #{tpu_custom_call.1} parent=1 // pred_fallthru
      _
    // Predicated region
    $region14: #{tpu_custom_call.1} parent=1 // pred_check
      _
    $region15: #{tpu_custom_call.1} parent=1 // pred_check_branch
      %52 = sbr.rel (0) target = $region17
    $region16: #{tpu_custom_call.1} parent=1 // pred_region
      %s54 = ssub.s32 4096, 4096
      %55 = vsyncadd [#allocation9], %s54
      %s56 = sshll.u32 [#allocation8], 4
      %s57 = int_to_ptr.vmem [resolvable:$true] %s56
      %62 = dma.hbm_to_vmem [thread:$0]  %s3, 4096, %s57, [#allocation9], 128, 128, 8
    $region17: #{tpu_custom_call.1} parent=1 // pred_fallthru
      _
    // Predicated region
    $region18: #{tpu_custom_call.1} parent=1 // pred_check
      _
    $region19: #{tpu_custom_call.1} parent=1 // pred_check_branch
      %64 = sbr.rel (0) target = $region21
    $region20: #{tpu_custom_call.1} parent=1 // pred_region
      %s66 = ssub.s32 2048, 2048
      %67 = vsyncadd [#allocation9], %s66
      %s68 = sshll.u32 [#allocation10], 4
      %s69 = int_to_ptr.vmem [resolvable:$true] %s68
      %74 = dma.hbm_to_vmem [thread:$0]  %s4, 2048, %s69, [#allocation9], 128, 128, 8
    $region21: #{tpu_custom_call.1} parent=1 // pred_fallthru
      _
    // Predicated region
    $region22: #{tpu_custom_call.1} parent=1 // pred_check
      _
    $region23: #{tpu_custom_call.1} parent=1 // pred_check_branch
      %76 = sbr.rel (0) target = $region25
    $region24: #{tpu_custom_call.1} parent=1 // pred_region
      _
    $region25: #{tpu_custom_call.1} parent=1 // pred_fallthru
      _
    // Predicated region
    $region26: #{tpu_custom_call.1} parent=1 // pred_check
      _
    $region27: #{tpu_custom_call.1} parent=1 // pred_check_branch
      %78 = sbr.rel (0) target = $region29
    $region28: #{tpu_custom_call.1} parent=1 // pred_region
      %79 = dma.done [#allocation3], 256
    $region29: #{tpu_custom_call.1} parent=1 // pred_fallthru
      _
    // Predicated region
    $region30: #{tpu_custom_call.1} parent=1 // pred_check
      _
    $region31: #{tpu_custom_call.1} parent=1 // pred_check_branch
      %81 = sbr.rel (0) target = $region33
    $region32: #{tpu_custom_call.1} parent=1 // pred_region
      %82 = dma.done [#allocation6], 6144
    $region33: #{tpu_custom_call.1} parent=1 // pred_fallthru
      _
    // Predicated region
    $region34: #{tpu_custom_call.1} parent=1 // pred_check
      _
    $region35: #{tpu_custom_call.1} parent=1 // pred_check_branch
      %84 = sbr.rel (0) target = $region37
    $region36: #{tpu_custom_call.1} parent=1 // pred_region
      %85 = dma.done [#allocation6], 8192
    $region37: #{tpu_custom_call.1} parent=1 // pred_fallthru
      _
    // Predicated region
    $region38: #{tpu_custom_call.1} parent=1 // pred_check
      _
    $region39: #{tpu_custom_call.1} parent=1 // pred_check_branch
      %87 = sbr.rel (0) target = $region41
    $region40: #{tpu_custom_call.1} parent=1 // pred_region
      %88 = dma.done [#allocation9], 4096
    $region41: #{tpu_custom_call.1} parent=1 // pred_fallthru
      _
    // Predicated region
    $region42: #{tpu_custom_call.1} parent=1 // pred_check
      _
    $region43: #{tpu_custom_call.1} parent=1 // pred_check_branch
      %90 = sbr.rel (0) target = $region45
    $region44: #{tpu_custom_call.1} parent=1 // pred_region
      %91 = dma.done [#allocation9], 2048
    $region45: #{tpu_custom_call.1} parent=1 // pred_fallthru
      _
    %v92 = vld [vmem:[%s5] sm:$0xff]
    %v93 = vld [vmem:[#allocation2] sm:$0xf]
    %v94 = vld [vmem:[#allocation2 + $0x4] sm:$0xf]
    %v95 = vld [vmem:[#allocation2 + $0x8] sm:$0xf]
    %v96 = vld [vmem:[#allocation2 + $0xc] sm:$0xf]
    %v97 = vld [vmem:[#allocation5] sm:$0xff]
    %v98 = vld [vmem:[#allocation5 + $0x8] sm:$0xff]
    %v99 = vld [vmem:[#allocation5 + $0x10] sm:$0xff]
    %v100 = vld [vmem:[#allocation5 + $0x18] sm:$0xff]
    %v101 = vld [vmem:[#allocation5 + $0x20] sm:$0xff]
    %v102 = vld [vmem:[#allocation5 + $0x28] sm:$0xff]
    %v103 = vld [vmem:[#allocation5 + $0x30] sm:$0xff]
    %v104 = vld [vmem:[#allocation5 + $0x38] sm:$0xff]
    %v105 = vld [vmem:[#allocation5 + $0x40] sm:$0xff]
    %v106 = vld [vmem:[#allocation5 + $0x48] sm:$0xff]
    %v107 = vld [vmem:[#allocation5 + $0x50] sm:$0xff]
    %v108 = vld [vmem:[#allocation5 + $0x58] sm:$0xff]
    %v109 = vld [vmem:[#allocation5 + $0x60] sm:$0xff]
    %v110 = vld [vmem:[#allocation5 + $0x68] sm:$0xff]
    %v111 = vld [vmem:[#allocation5 + $0x70] sm:$0xff]
    %v112 = vld [vmem:[#allocation5 + $0x78] sm:$0xff]
    %v113 = vld [vmem:[#allocation5 + $0x80] sm:$0xff]
    %v114 = vld [vmem:[#allocation5 + $0x88] sm:$0xff]
    %v115 = vld [vmem:[#allocation5 + $0x90] sm:$0xff]
    %v116 = vld [vmem:[#allocation5 + $0x98] sm:$0xff]
    %v117 = vld [vmem:[#allocation5 + $0xa0] sm:$0xff]
    %v118 = vld [vmem:[#allocation5 + $0xa8] sm:$0xff]
    %v119 = vld [vmem:[#allocation5 + $0xb0] sm:$0xff]
    %v120 = vld [vmem:[#allocation5 + $0xb8] sm:$0xff]
    %v121 = vld [vmem:[#allocation5 + $0xc0] sm:$0xff]
    %v122 = vld [vmem:[#allocation5 + $0xc8] sm:$0xff]
    %v123 = vld [vmem:[#allocation5 + $0xd0] sm:$0xff]
    %v124 = vld [vmem:[#allocation5 + $0xd8] sm:$0xff]
    %v125 = vld [vmem:[#allocation5 + $0xe0] sm:$0xff]
    %v126 = vld [vmem:[#allocation5 + $0xe8] sm:$0xff]
    %v127 = vld [vmem:[#allocation5 + $0xf0] sm:$0xff]
    %v128 = vld [vmem:[#allocation5 + $0xf8] sm:$0xff]
    %v129 = vld [vmem:[#allocation5 + $0x100] sm:$0xff]
    %v130 = vld [vmem:[#allocation5 + $0x108] sm:$0xff]
    %v131 = vld [vmem:[#allocation5 + $0x110] sm:$0xff]
    %v132 = vld [vmem:[#allocation5 + $0x118] sm:$0xff]
    %v133 = vld [vmem:[#allocation5 + $0x120] sm:$0xff]
    %v134 = vld [vmem:[#allocation5 + $0x128] sm:$0xff]
    %v135 = vld [vmem:[#allocation5 + $0x130] sm:$0xff]
    %v136 = vld [vmem:[#allocation5 + $0x138] sm:$0xff]
    %v137 = vld [vmem:[#allocation5 + $0x140] sm:$0xff]
    %v138 = vld [vmem:[#allocation5 + $0x148] sm:$0xff]
    %v139 = vld [vmem:[#allocation5 + $0x150] sm:$0xff]
    %v140 = vld [vmem:[#allocation5 + $0x158] sm:$0xff]
    %v141 = vld [vmem:[#allocation5 + $0x160] sm:$0xff]
    %v142 = vld [vmem:[#allocation5 + $0x168] sm:$0xff]
    %v143 = vld [vmem:[#allocation5 + $0x170] sm:$0xff]
    %v144 = vld [vmem:[#allocation5 + $0x178] sm:$0xff]
    %v146 = vlaneseq
    %v147 = vshrl.u32 %v146, 7
    %v148 = vsub.s32 0, %v147
    %v149 = vrot.slane %v92, %v148
    %v150 = vlaneseq
    %v151 = vshrl.u32 %v150, 7
    %v152 = vsub.s32 4, %v151
    %v153 = vrot.slane %v92, %v152
    %v156 = vlaneseq
    %v157 = vshrl.u32 %v156, 7
    %v158 = vsub.s32 0, %v157
    %v159 = vrot.slane %v149, %v158
    %v160 = vlaneseq
    %v161 = vshrl.u32 %v160, 7
    %v162 = vsub.s32 0, %v161
    %v163 = vrot.slane %v153, %v162
    %v168 = vcombine.low %v93, %v94
    %v169 = vcombine.low %v95, %v96
    %v171 = vunpack.c.l.s4 1983009808
    %v172 = vunpack.c.0.s8 %v171
    %v173 = vlaneseq
    %v174 = vshrl.u32 %v173, 7
    %v175 = vsub.s32 %v172, %v174
    %v176 = vrot.slane %v168, %v175
    %v178 = vunpack.c.l.s4 1983009808
    %v179 = vunpack.c.0.s8 %v178
    %v180 = vlaneseq
    %v181 = vshrl.u32 %v180, 7
    %v182 = vsub.s32 %v179, %v181
    %v183 = vrot.slane %v169, %v182
    %v184 = vcombine.low %v176, %v183
    %v185 = vcombine.high %v176, %v183
    %vm187 = vcmask 523264
    %v188 = vsel %vm187, %v185, 0
    %190 = vmatprep.subr.mxu0 %v98
    %191 = vmatpush1.msra.mxu0 %v97
    %192 = vmatprep.subr.mxu0 %v100
    %193 = vmatpush1.msra.mxu0 %v99
    %194 = vmatprep.subr.mxu0 %v102
    %195 = vmatpush1.msra.mxu0 %v101
    %196 = vmatprep.subr.mxu0 %v104
    %197 = vmatpush1.msra.mxu0 %v103
    %198 = vmatprep.subr.mxu0 %v106
    %199 = vmatpush1.msra.mxu0 %v105
    %200 = vmatprep.subr.mxu0 %v108
    %201 = vmatpush1.msra.mxu0 %v107
    %202 = vmatprep.subr.mxu0 %v110
    %203 = vmatpush1.msra.mxu0 %v109
    %204 = vmatprep.subr.mxu0 %v112
    %205 = vmatpush1.msra.mxu0 %v111
    %206 = vmatprep.subr.mxu0 %v114
    %207 = vmatpush1.msra.mxu0 %v113
    %208 = vmatprep.subr.mxu0 %v116
    %209 = vmatpush1.msra.mxu0 %v115
    %210 = vmatprep.subr.mxu0 %v118
    %211 = vmatpush1.msra.mxu0 %v117
    %212 = vmatprep.subr.mxu0 %v120
    %213 = vmatpush1.msra.mxu0 %v119
    %214 = vmatprep.subr.mxu0 %v122
    %215 = vmatpush1.msra.mxu0 %v121
    %216 = vmatprep.subr.mxu0 %v124
    %217 = vmatpush1.msra.mxu0 %v123
    %218 = vmatprep.subr.mxu0 %v126
    %219 = vmatpush1.msra.mxu0 %v125
    %220 = vmatprep.subr.mxu0 %v128
    %221 = vmatpush1.msra.mxu0 %v127
    %222 = vmatprep.subr.mxu0 %v130
    %223 = vmatpush1.msra.mxu0 %v129
    %224 = vmatprep.subr.mxu0 %v132
    %225 = vmatpush1.msra.mxu0 %v131
    %226 = vmatprep.subr.mxu0 %v134
    %227 = vmatpush1.msra.mxu0 %v133
    %228 = vmatprep.subr.mxu0 %v136
    %229 = vmatpush1.msra.mxu0 %v135
    %230 = vmatprep.subr.mxu0 %v138
    %231 = vmatpush1.msra.mxu0 %v137
    %232 = vmatprep.subr.mxu0 %v140
    %233 = vmatpush1.msra.mxu0 %v139
    %234 = vmatprep.subr.mxu0 %v142
    %235 = vmatpush1.msra.mxu0 %v141
    %236 = vmatprep.subr.mxu0 %v144
    %237 = vmatpush1.msra.mxu0 %v143
    %238 = vmatprep.subr.mxu0 0.0
    %239 = vmatpush1.msra.mxu0 0.0
    %240 = vmatprep.subr.mxu0 0.0
    %241 = vmatpush1.msra.mxu0 0.0
    %242 = vmatprep.subr.mxu0 0.0
    %243 = vmatpush1.msra.mxu0 0.0
    %244 = vmatprep.subr.mxu0 0.0
    %245 = vmatpush1.msra.mxu0 0.0
    %246 = vmatprep.subr.mxu0 0.0
    %247 = vmatpush1.msra.mxu0 0.0
    %248 = vmatprep.subr.mxu0 0.0
    %249 = vmatpush1.msra.mxu0 0.0
    %250 = vmatprep.subr.mxu0 0.0
    %251 = vmatpush1.msra.mxu0 0.0
    %252 = vmatprep.subr.mxu0 0.0
    %253 = vmatpush1.msra.mxu0 0.0
    %254 = vmatprep.mubr.f32.mxu0 %v188
    %255 = vmatmul.mubr.f32.gmra.mrb[0].mxu0 %v184
    %v256 = vpop.f32.mrb[0].mxu0
    %v257 = vadd.f32 %v159, %v256
    %v258 = vpop.f32.mrb[0].mxu0
    %v259 = vadd.f32 %v163, %v258
    %260 = vdwg.mxu0
    %vm261 = vcmp.ge.f32.partialorder %v257, 0.0
    %vm262 = vcmp.ge.f32.partialorder %v259, 0.0
    %v263 = vmul.f32 %v257, 0.01
    %v264 = vmul.f32 %v259, 0.01
    %v265 = vsel %vm261, %v257, %v263
    %v266 = vsel %vm262, %v259, %v264
    %v267 = vld [vmem:[#allocation7] sm:$0xff]
    %v268 = vld [vmem:[#allocation7 + $0x8] sm:$0xff]
    %v269 = vld [vmem:[#allocation7 + $0x10] sm:$0xff]
    %v270 = vld [vmem:[#allocation7 + $0x18] sm:$0xff]
    %v271 = vld [vmem:[#allocation7 + $0x20] sm:$0xff]
    %v272 = vld [vmem:[#allocation7 + $0x28] sm:$0xff]
    %v273 = vld [vmem:[#allocation7 + $0x30] sm:$0xff]
    %v274 = vld [vmem:[#allocation7 + $0x38] sm:$0xff]
    %v275 = vld [vmem:[#allocation7 + $0x40] sm:$0xff]
    %v276 = vld [vmem:[#allocation7 + $0x48] sm:$0xff]
    %v277 = vld [vmem:[#allocation7 + $0x50] sm:$0xff]
    %v278 = vld [vmem:[#allocation7 + $0x58] sm:$0xff]
    %v279 = vld [vmem:[#allocation7 + $0x60] sm:$0xff]
    %v280 = vld [vmem:[#allocation7 + $0x68] sm:$0xff]
    %v281 = vld [vmem:[#allocation7 + $0x70] sm:$0xff]
    %v282 = vld [vmem:[#allocation7 + $0x78] sm:$0xff]
    %v283 = vld [vmem:[#allocation7 + $0x80] sm:$0xff]
    %v284 = vld [vmem:[#allocation7 + $0x88] sm:$0xff]
    %v285 = vld [vmem:[#allocation7 + $0x90] sm:$0xff]
    %v286 = vld [vmem:[#allocation7 + $0x98] sm:$0xff]
    %v287 = vld [vmem:[#allocation7 + $0xa0] sm:$0xff]
    %v288 = vld [vmem:[#allocation7 + $0xa8] sm:$0xff]
    %v289 = vld [vmem:[#allocation7 + $0xb0] sm:$0xff]
    %v290 = vld [vmem:[#allocation7 + $0xb8] sm:$0xff]
    %v291 = vld [vmem:[#allocation7 + $0xc0] sm:$0xff]
    %v292 = vld [vmem:[#allocation7 + $0xc8] sm:$0xff]
    %v293 = vld [vmem:[#allocation7 + $0xd0] sm:$0xff]
    %v294 = vld [vmem:[#allocation7 + $0xd8] sm:$0xff]
    %v295 = vld [vmem:[#allocation7 + $0xe0] sm:$0xff]
    %v296 = vld [vmem:[#allocation7 + $0xe8] sm:$0xff]
    %v297 = vld [vmem:[#allocation7 + $0xf0] sm:$0xff]
    %v298 = vld [vmem:[#allocation7 + $0xf8] sm:$0xff]
    %v299 = vld [vmem:[#allocation7 + $0x100] sm:$0xff]
    %v300 = vld [vmem:[#allocation7 + $0x108] sm:$0xff]
    %v301 = vld [vmem:[#allocation7 + $0x110] sm:$0xff]
    %v302 = vld [vmem:[#allocation7 + $0x118] sm:$0xff]
    %v303 = vld [vmem:[#allocation7 + $0x120] sm:$0xff]
    %v304 = vld [vmem:[#allocation7 + $0x128] sm:$0xff]
    %v305 = vld [vmem:[#allocation7 + $0x130] sm:$0xff]
    %v306 = vld [vmem:[#allocation7 + $0x138] sm:$0xff]
    %v307 = vld [vmem:[#allocation7 + $0x140] sm:$0xff]
    %v308 = vld [vmem:[#allocation7 + $0x148] sm:$0xff]
    %v309 = vld [vmem:[#allocation7 + $0x150] sm:$0xff]
    %v310 = vld [vmem:[#allocation7 + $0x158] sm:$0xff]
    %v311 = vld [vmem:[#allocation7 + $0x160] sm:$0xff]
    %v312 = vld [vmem:[#allocation7 + $0x168] sm:$0xff]
    %v313 = vld [vmem:[#allocation7 + $0x170] sm:$0xff]
    %v314 = vld [vmem:[#allocation7 + $0x178] sm:$0xff]
    %v315 = vld [vmem:[#allocation7 + $0x180] sm:$0xff]
    %v316 = vld [vmem:[#allocation7 + $0x188] sm:$0xff]
    %v317 = vld [vmem:[#allocation7 + $0x190] sm:$0xff]
    %v318 = vld [vmem:[#allocation7 + $0x198] sm:$0xff]
    %v319 = vld [vmem:[#allocation7 + $0x1a0] sm:$0xff]
    %v320 = vld [vmem:[#allocation7 + $0x1a8] sm:$0xff]
    %v321 = vld [vmem:[#allocation7 + $0x1b0] sm:$0xff]
    %v322 = vld [vmem:[#allocation7 + $0x1b8] sm:$0xff]
    %v323 = vld [vmem:[#allocation7 + $0x1c0] sm:$0xff]
    %v324 = vld [vmem:[#allocation7 + $0x1c8] sm:$0xff]
    %v325 = vld [vmem:[#allocation7 + $0x1d0] sm:$0xff]
    %v326 = vld [vmem:[#allocation7 + $0x1d8] sm:$0xff]
    %v327 = vld [vmem:[#allocation7 + $0x1e0] sm:$0xff]
    %v328 = vld [vmem:[#allocation7 + $0x1e8] sm:$0xff]
    %v329 = vld [vmem:[#allocation7 + $0x1f0] sm:$0xff]
    %v330 = vld [vmem:[#allocation7 + $0x1f8] sm:$0xff]
    %v331 = vlaneseq
    %v332 = vshrl.u32 %v331, 7
    %v333 = vsub.s32 1, %v332
    %v334 = vrot.slane %v92, %v333
    %v335 = vlaneseq
    %v336 = vshrl.u32 %v335, 7
    %v337 = vsub.s32 5, %v336
    %v338 = vrot.slane %v92, %v337
    %v341 = vlaneseq
    %v342 = vshrl.u32 %v341, 7
    %v343 = vsub.s32 1, %v342
    %v344 = vrot.slane %v334, %v343
    %v345 = vlaneseq
    %v346 = vshrl.u32 %v345, 7
    %v347 = vsub.s32 1, %v346
    %v348 = vrot.slane %v338, %v347
    %349 = vmatprep.subr.mxu0 %v268
    %350 = vmatpush1.msra.mxu0 %v267
    %351 = vmatprep.subr.mxu0 %v270
    %352 = vmatpush1.msra.mxu0 %v269
    %353 = vmatprep.subr.mxu0 %v272
    %354 = vmatpush1.msra.mxu0 %v271
    %355 = vmatprep.subr.mxu0 %v274
    %356 = vmatpush1.msra.mxu0 %v273
    %357 = vmatprep.subr.mxu0 %v276
    %358 = vmatpush1.msra.mxu0 %v275
    %359 = vmatprep.subr.mxu0 %v278
    %360 = vmatpush1.msra.mxu0 %v277
    %361 = vmatprep.subr.mxu0 %v280
    %362 = vmatpush1.msra.mxu0 %v279
    %363 = vmatprep.subr.mxu0 %v282
    %364 = vmatpush1.msra.mxu0 %v281
    %365 = vmatprep.subr.mxu0 %v284
    %366 = vmatpush1.msra.mxu0 %v283
    %367 = vmatprep.subr.mxu0 %v286
    %368 = vmatpush1.msra.mxu0 %v285
    %369 = vmatprep.subr.mxu0 %v288
    %370 = vmatpush1.msra.mxu0 %v287
    %371 = vmatprep.subr.mxu0 %v290
    %372 = vmatpush1.msra.mxu0 %v289
    %373 = vmatprep.subr.mxu0 %v292
    %374 = vmatpush1.msra.mxu0 %v291
    %375 = vmatprep.subr.mxu0 %v294
    %376 = vmatpush1.msra.mxu0 %v293
    %377 = vmatprep.subr.mxu0 %v296
    %378 = vmatpush1.msra.mxu0 %v295
    %379 = vmatprep.subr.mxu0 %v298
    %380 = vmatpush1.msra.mxu0 %v297
    %381 = vmatprep.subr.mxu0 %v300
    %382 = vmatpush1.msra.mxu0 %v299
    %383 = vmatprep.subr.mxu0 %v302
    %384 = vmatpush1.msra.mxu0 %v301
    %385 = vmatprep.subr.mxu0 %v304
    %386 = vmatpush1.msra.mxu0 %v303
    %387 = vmatprep.subr.mxu0 %v306
    %388 = vmatpush1.msra.mxu0 %v305
    %389 = vmatprep.subr.mxu0 %v308
    %390 = vmatpush1.msra.mxu0 %v307
    %391 = vmatprep.subr.mxu0 %v310
    %392 = vmatpush1.msra.mxu0 %v309
    %393 = vmatprep.subr.mxu0 %v312
    %394 = vmatpush1.msra.mxu0 %v311
    %395 = vmatprep.subr.mxu0 %v314
    %396 = vmatpush1.msra.mxu0 %v313
    %397 = vmatprep.subr.mxu0 %v316
    %398 = vmatpush1.msra.mxu0 %v315
    %399 = vmatprep.subr.mxu0 %v318
    %400 = vmatpush1.msra.mxu0 %v317
    %401 = vmatprep.subr.mxu0 %v320
    %402 = vmatpush1.msra.mxu0 %v319
    %403 = vmatprep.subr.mxu0 %v322
    %404 = vmatpush1.msra.mxu0 %v321
    %405 = vmatprep.subr.mxu0 %v324
    %406 = vmatpush1.msra.mxu0 %v323
    %407 = vmatprep.subr.mxu0 %v326
    %408 = vmatpush1.msra.mxu0 %v325
    %409 = vmatprep.subr.mxu0 %v328
    %410 = vmatpush1.msra.mxu0 %v327
    %411 = vmatprep.subr.mxu0 %v330
    %412 = vmatpush1.msra.mxu0 %v329
    %413 = vmatprep.mubr.f32.mxu0 %v266
    %414 = vmatmul.mubr.f32.gmra.mrb[0].mxu0 %v265
    %v415 = vpop.f32.mrb[0].mxu0
    %v416 = vadd.f32 %v344, %v415
    %v417 = vpop.f32.mrb[0].mxu0
    %v418 = vadd.f32 %v348, %v417
    %419 = vdwg.mxu0
    %vm420 = vcmp.ge.f32.partialorder %v416, 0.0
    %vm421 = vcmp.ge.f32.partialorder %v418, 0.0
    %v422 = vmul.f32 %v416, 0.01
    %v423 = vmul.f32 %v418, 0.01
    %v424 = vsel %vm420, %v416, %v422
    %v425 = vsel %vm421, %v418, %v423
    %v426 = vld [vmem:[#allocation8] sm:$0xff]
    %v427 = vld [vmem:[#allocation8 + $0x8] sm:$0xff]
    %v428 = vld [vmem:[#allocation8 + $0x10] sm:$0xff]
    %v429 = vld [vmem:[#allocation8 + $0x18] sm:$0xff]
    %v430 = vld [vmem:[#allocation8 + $0x20] sm:$0xff]
    %v431 = vld [vmem:[#allocation8 + $0x28] sm:$0xff]
    %v432 = vld [vmem:[#allocation8 + $0x30] sm:$0xff]
    %v433 = vld [vmem:[#allocation8 + $0x38] sm:$0xff]
    %v434 = vld [vmem:[#allocation8 + $0x40] sm:$0xff]
    %v435 = vld [vmem:[#allocation8 + $0x48] sm:$0xff]
    %v436 = vld [vmem:[#allocation8 + $0x50] sm:$0xff]
    %v437 = vld [vmem:[#allocation8 + $0x58] sm:$0xff]
    %v438 = vld [vmem:[#allocation8 + $0x60] sm:$0xff]
    %v439 = vld [vmem:[#allocation8 + $0x68] sm:$0xff]
    %v440 = vld [vmem:[#allocation8 + $0x70] sm:$0xff]
    %v441 = vld [vmem:[#allocation8 + $0x78] sm:$0xff]
    %v442 = vld [vmem:[#allocation8 + $0x80] sm:$0xff]
    %v443 = vld [vmem:[#allocation8 + $0x88] sm:$0xff]
    %v444 = vld [vmem:[#allocation8 + $0x90] sm:$0xff]
    %v445 = vld [vmem:[#allocation8 + $0x98] sm:$0xff]
    %v446 = vld [vmem:[#allocation8 + $0xa0] sm:$0xff]
    %v447 = vld [vmem:[#allocation8 + $0xa8] sm:$0xff]
    %v448 = vld [vmem:[#allocation8 + $0xb0] sm:$0xff]
    %v449 = vld [vmem:[#allocation8 + $0xb8] sm:$0xff]
    %v450 = vld [vmem:[#allocation8 + $0xc0] sm:$0xff]
    %v451 = vld [vmem:[#allocation8 + $0xc8] sm:$0xff]
    %v452 = vld [vmem:[#allocation8 + $0xd0] sm:$0xff]
    %v453 = vld [vmem:[#allocation8 + $0xd8] sm:$0xff]
    %v454 = vld [vmem:[#allocation8 + $0xe0] sm:$0xff]
    %v455 = vld [vmem:[#allocation8 + $0xe8] sm:$0xff]
    %v456 = vld [vmem:[#allocation8 + $0xf0] sm:$0xff]
    %v457 = vld [vmem:[#allocation8 + $0xf8] sm:$0xff]
    %v458 = vlaneseq
    %v459 = vshrl.u32 %v458, 7
    %v460 = vsub.s32 2, %v459
    %v461 = vrot.slane %v92, %v460
    %462 = vmatprep.subr.mxu0 0.0
    %463 = vmatpush1.msra.mxu0 %v426
    %464 = vmatprep.subr.mxu0 0.0
    %465 = vmatpush1.msra.mxu0 %v427
    %466 = vmatprep.subr.mxu0 0.0
    %467 = vmatpush1.msra.mxu0 %v428
    %468 = vmatprep.subr.mxu0 0.0
    %469 = vmatpush1.msra.mxu0 %v429
    %470 = vmatprep.subr.mxu0 0.0
    %471 = vmatpush1.msra.mxu0 %v430
    %472 = vmatprep.subr.mxu0 0.0
    %473 = vmatpush1.msra.mxu0 %v431
    %474 = vmatprep.subr.mxu0 0.0
    %475 = vmatpush1.msra.mxu0 %v432
    %476 = vmatprep.subr.mxu0 0.0
    %477 = vmatpush1.msra.mxu0 %v433
    %478 = vmatprep.subr.mxu0 0.0
    %479 = vmatpush1.msra.mxu0 %v434
    %480 = vmatprep.subr.mxu0 0.0
    %481 = vmatpush1.msra.mxu0 %v435
    %482 = vmatprep.subr.mxu0 0.0
    %483 = vmatpush1.msra.mxu0 %v436
    %484 = vmatprep.subr.mxu0 0.0
    %485 = vmatpush1.msra.mxu0 %v437
    %486 = vmatprep.subr.mxu0 0.0
    %487 = vmatpush1.msra.mxu0 %v438
    %488 = vmatprep.subr.mxu0 0.0
    %489 = vmatpush1.msra.mxu0 %v439
    %490 = vmatprep.subr.mxu0 0.0
    %491 = vmatpush1.msra.mxu0 %v440
    %492 = vmatprep.subr.mxu0 0.0
    %493 = vmatpush1.msra.mxu0 %v441
    %494 = vmatprep.subr.mxu0 0.0
    %495 = vmatpush1.msra.mxu0 %v442
    %496 = vmatprep.subr.mxu0 0.0
    %497 = vmatpush1.msra.mxu0 %v443
    %498 = vmatprep.subr.mxu0 0.0
    %499 = vmatpush1.msra.mxu0 %v444
    %500 = vmatprep.subr.mxu0 0.0
    %501 = vmatpush1.msra.mxu0 %v445
    %502 = vmatprep.subr.mxu0 0.0
    %503 = vmatpush1.msra.mxu0 %v446
    %504 = vmatprep.subr.mxu0 0.0
    %505 = vmatpush1.msra.mxu0 %v447
    %506 = vmatprep.subr.mxu0 0.0
    %507 = vmatpush1.msra.mxu0 %v448
    %508 = vmatprep.subr.mxu0 0.0
    %509 = vmatpush1.msra.mxu0 %v449
    %510 = vmatprep.subr.mxu0 0.0
    %511 = vmatpush1.msra.mxu0 %v450
    %512 = vmatprep.subr.mxu0 0.0
    %513 = vmatpush1.msra.mxu0 %v451
    %514 = vmatprep.subr.mxu0 0.0
    %515 = vmatpush1.msra.mxu0 %v452
    %516 = vmatprep.subr.mxu0 0.0
    %517 = vmatpush1.msra.mxu0 %v453
    %518 = vmatprep.subr.mxu0 0.0
    %519 = vmatpush1.msra.mxu0 %v454
    %520 = vmatprep.subr.mxu0 0.0
    %521 = vmatpush1.msra.mxu0 %v455
    %522 = vmatprep.subr.mxu0 0.0
    %523 = vmatpush1.msra.mxu0 %v456
    %524 = vmatprep.subr.mxu0 0.0
    %525 = vmatpush1.msra.mxu0 %v457
    %526 = vmatprep.mubr.f32.mxu0 %v425
    %527 = vmatmul.mubr.f32.gmra.mrb[0].mxu0 %v424
    %v528 = vpop.f32.mrb[0].mxu0
    %v529 = vadd.f32 %v461, %v528
    %v530 = vpop.f32.mrb[0].mxu0
    %531 = vdwg.mxu0
    %vm532 = vcmp.ge.f32.partialorder %v529, 0.0
    %v533 = vmul.f32 %v529, 0.01
    %v534 = vsel %vm532, %v529, %v533
    %v535 = vld [vmem:[#allocation10] sm:$0xff]
    %v536 = vld [vmem:[#allocation10 + $0x8] sm:$0xff]
    %v537 = vld [vmem:[#allocation10 + $0x10] sm:$0xff]
    %v538 = vld [vmem:[#allocation10 + $0x18] sm:$0xff]
    %v539 = vld [vmem:[#allocation10 + $0x20] sm:$0xff]
    %v540 = vld [vmem:[#allocation10 + $0x28] sm:$0xff]
    %v541 = vld [vmem:[#allocation10 + $0x30] sm:$0xff]
    %v542 = vld [vmem:[#allocation10 + $0x38] sm:$0xff]
    %v543 = vld [vmem:[#allocation10 + $0x40] sm:$0xff]
    %v544 = vld [vmem:[#allocation10 + $0x48] sm:$0xff]
    %v545 = vld [vmem:[#allocation10 + $0x50] sm:$0xff]
    %v546 = vld [vmem:[#allocation10 + $0x58] sm:$0xff]
    %v547 = vld [vmem:[#allocation10 + $0x60] sm:$0xff]
    %v548 = vld [vmem:[#allocation10 + $0x68] sm:$0xff]
    %v549 = vld [vmem:[#allocation10 + $0x70] sm:$0xff]
    %v550 = vld [vmem:[#allocation10 + $0x78] sm:$0xff]
    %v551 = vlaneseq
    %v552 = vshrl.u32 %v551, 7
    %v553 = vsub.s32 3, %v552
    %v554 = vrot.slane %v92, %v553
    %555 = vmatprep.subr.mxu0 0.0
    %556 = vmatpush1.msra.mxu0 %v535
    %557 = vmatprep.subr.mxu0 0.0
    %558 = vmatpush1.msra.mxu0 %v536
    %559 = vmatprep.subr.mxu0 0.0
    %560 = vmatpush1.msra.mxu0 %v537
    %561 = vmatprep.subr.mxu0 0.0
    %562 = vmatpush1.msra.mxu0 %v538
    %563 = vmatprep.subr.mxu0 0.0
    %564 = vmatpush1.msra.mxu0 %v539
    %565 = vmatprep.subr.mxu0 0.0
    %566 = vmatpush1.msra.mxu0 %v540
    %567 = vmatprep.subr.mxu0 0.0
    %568 = vmatpush1.msra.mxu0 %v541
    %569 = vmatprep.subr.mxu0 0.0
    %570 = vmatpush1.msra.mxu0 %v542
    %571 = vmatprep.subr.mxu0 0.0
    %572 = vmatpush1.msra.mxu0 %v543
    %573 = vmatprep.subr.mxu0 0.0
    %574 = vmatpush1.msra.mxu0 %v544
    %575 = vmatprep.subr.mxu0 0.0
    %576 = vmatpush1.msra.mxu0 %v545
    %577 = vmatprep.subr.mxu0 0.0
    %578 = vmatpush1.msra.mxu0 %v546
    %579 = vmatprep.subr.mxu0 0.0
    %580 = vmatpush1.msra.mxu0 %v547
    %581 = vmatprep.subr.mxu0 0.0
    %582 = vmatpush1.msra.mxu0 %v548
    %583 = vmatprep.subr.mxu0 0.0
    %584 = vmatpush1.msra.mxu0 %v549
    %585 = vmatprep.subr.mxu0 0.0
    %586 = vmatpush1.msra.mxu0 %v550
    %587 = vmatprep.subr.mxu0 0.0
    %588 = vmatpush1.msra.mxu0 0.0
    %589 = vmatprep.subr.mxu0 0.0
    %590 = vmatpush1.msra.mxu0 0.0
    %591 = vmatprep.subr.mxu0 0.0
    %592 = vmatpush1.msra.mxu0 0.0
    %593 = vmatprep.subr.mxu0 0.0
    %594 = vmatpush1.msra.mxu0 0.0
    %595 = vmatprep.subr.mxu0 0.0
    %596 = vmatpush1.msra.mxu0 0.0
    %597 = vmatprep.subr.mxu0 0.0
    %598 = vmatpush1.msra.mxu0 0.0
    %599 = vmatprep.subr.mxu0 0.0
    %600 = vmatpush1.msra.mxu0 0.0
    %601 = vmatprep.subr.mxu0 0.0
    %602 = vmatpush1.msra.mxu0 0.0
    %603 = vmatprep.subr.mxu0 0.0
    %604 = vmatpush1.msra.mxu0 0.0
    %605 = vmatprep.subr.mxu0 0.0
    %606 = vmatpush1.msra.mxu0 0.0
    %607 = vmatprep.subr.mxu0 0.0
    %608 = vmatpush1.msra.mxu0 0.0
    %609 = vmatprep.subr.mxu0 0.0
    %610 = vmatpush1.msra.mxu0 0.0
    %611 = vmatprep.subr.mxu0 0.0
    %612 = vmatpush1.msra.mxu0 0.0
    %613 = vmatprep.subr.mxu0 0.0
    %614 = vmatpush1.msra.mxu0 0.0
    %615 = vmatprep.subr.mxu0 0.0
    %616 = vmatpush1.msra.mxu0 0.0
    %617 = vmatprep.subr.mxu0 0.0
    %618 = vmatpush1.msra.mxu0 0.0
    %619 = vmatprep.mubr.f32.mxu0 0.0
    %620 = vmatmul.mubr.f32.gmra.mrb[0].mxu0 %v534
    %v621 = vpop.f32.mrb[0].mxu0
    %v622 = vadd.f32 %v554, %v621
    %v623 = vpop.f32.mrb[0].mxu0
    %624 = vdwg.mxu0
    %625 = vst [vmem:[#allocation11] sm:$0xff] %v622
    // Predicated region
    $region46: #{tpu_custom_call.1} parent=1 // pred_check
      _
    $region47: #{tpu_custom_call.1} parent=1 // pred_check_branch
      %627 = sbr.rel (0) target = $region49
    $region48: #{tpu_custom_call.1} parent=1 // pred_region
      %s629 = ssub.s32 128, 32
      %630 = vsyncadd [#allocation4], %s629
      %s631 = sshll.u32 [#allocation11], 4
      %s632 = int_to_ptr.vmem [resolvable:$true] %s631
      %637 = dma.vmem_to_hbm [thread:$0]  %s632, 32, %s6, [#allocation4], 32, 32, 2
    $region49: #{tpu_custom_call.1} parent=1 // pred_fallthru
      _
    // Predicated region
    $region50: #{tpu_custom_call.1} parent=1 // pred_check
      _
    $region51: #{tpu_custom_call.1} parent=1 // pred_check_branch
      %639 = sbr.rel (0) target = $region53
    $region52: #{tpu_custom_call.1} parent=1 // pred_region
      %640 = dma.done [#allocation4], 128
    $region53: #{tpu_custom_call.1} parent=1 // pred_fallthru
      _
    %641 = vsyncpa [#allocation3], 1
    %642 = vsyncpa [#allocation6], 1
    %643 = vsyncpa [#allocation9], 1
    %644 = vsyncpa [#allocation4], 1

</llo_original>
